<compile_context>
chip_gen: v6e
topology: v6e:2x2x1
jax: 0.10.0
libtpu: 0.0.40
codegen_flags: <defaults>
</compile_context>

<pallas_src>
import functools

import numpy as np
import jax
import jax.numpy as jnp
from jax.experimental import pallas as pl
from jax.experimental.pallas import tpu as pltpu


# ---------------------------------------------------------------------------
# Fused kernel: (conv1|conv2|conv3) + bias + ReLU + time-max + FC + softmax.
# ---------------------------------------------------------------------------
def fused_textcnn_kernel(x_ref, w_ref, bmask_ref, fcw_ref, fcb_ref, o_ref):
    # x_ref:     (TB, S, E)        input embeddings (one batch block)
    # w_ref:     (E, kh_max*CP)    tap-concatenated conv weights; each tap
    #                              block is CP lanes (CP multiple of 128),
    #                              zero-padded for missing taps / channels
    # bmask_ref: (S, CP)           conv bias at valid time rows, -1e30 at
    #                              invalid rows and padded channels
    # fcw_ref:   (CP, K)           fc weight (pre-transposed, zero-padded rows)
    # fcb_ref:   (1, K)            fc bias
    # o_ref:     (TB, K)           class probabilities (float32)
    TB, S, E = x_ref.shape
    CP = bmask_ref.shape[1]
    kh_max = w_ref.shape[1] // CP
    n_rows = TB * S

    # Single load of x; the (TB, S) -> (TB*S) merge is sublane aligned
    # (S is a multiple of the sublane packing at these shapes).
    x2 = x_ref[...].reshape(n_rows, E)

    # All taps of all branches in ONE lane-wide MXU matmul, f32 accumulation.
    p_all = jnp.dot(x2, w_ref[...], preferred_element_type=jnp.float32)

    # Conv = shift-add of per-tap 128-lane-aligned slices.  pltpu.roll keeps
    # the shift on the otherwise-idle XLU; shift = n_rows - t == -t (mod n)
    # so out[r] = p[r + t].  Rows that wrap around (or bleed across batch
    # boundaries in the flattened view) only land at time positions
    # s >= S - t, which the -1e30 mask kills for every branch whose tap t is
    # nonzero (t < kh  =>  S - t >= S - kh + 1, the start of the masked zone).
    acc = p_all[:, 0:CP]
    for t in range(1, kh_max):                    # tiny static unroll
        p_t = p_all[:, t * CP:(t + 1) * CP]       # lane-tile aligned view
        acc = acc + pltpu.roll(p_t, shift=n_rows - t, axis=0)

    # Bias + validity mask (-1e30 -> ReLU 0, never beats a valid post-ReLU
    # max), then ReLU and max-pool over the time axis.
    pre = acc.reshape(TB, S, CP) + bmask_ref[...][None, :, :]
    feat = jnp.max(jnp.maximum(pre, 0.0), axis=1)              # (TB, CP)

    # Dropout: identity in eval mode.
    # Linear + Softmax(dim=1); reciprocal on the EUP slot + one Newton step.
    logits = jnp.dot(feat.astype(fcw_ref.dtype), fcw_ref[...],
                     preferred_element_type=jnp.float32) + fcb_ref[...]
    m = jnp.max(logits, axis=1, keepdims=True)
    e = jnp.exp(logits - m)
    s = jnp.sum(e, axis=1, keepdims=True)
    inv = pl.reciprocal(s, approx=True)           # EUP (free slot)
    inv = inv * (2.0 - s * inv)                   # Newton step -> ~f32 accuracy
    o_ref[...] = (e * inv).astype(o_ref.dtype)


# ---------------------------------------------------------------------------
# One-time (model-load) parameter preparation — hoisted off the forward path.
# ---------------------------------------------------------------------------
def prepare_params(params, seq_len, *, compute_dtype=jnp.float32):
    ws = [np.asarray(params[f"conv{i}_w"], np.float32) for i in (1, 2, 3)]  # (C_i,1,kh_i,E) OIHW
    bs = [np.asarray(params[f"conv{i}_b"], np.float32) for i in (1, 2, 3)]  # (C_i,)
    khs = [int(w.shape[2]) for w in ws]
    kh_max = max(khs)
    E = int(ws[0].shape[3])
    S = int(seq_len)
    assert S >= kh_max, "sequence length must be >= largest kernel height"

    c_total = int(sum(w.shape[0] for w in ws))
    CP = ((c_total + 127) // 128) * 128      # lane-tile-aligned per-tap block width
    K = int(np.asarray(params["fc_w"]).shape[0])

    # W_cat: (E, kh_max*CP).  Tap t of branch `br` occupies lanes
    # [t*CP + off_br, t*CP + off_br + C_br); everything else stays zero.
    w_cat = np.zeros((E, kh_max * CP), np.float32)
    # bmask: bias on valid conv rows, -1e30 on rows past each branch's valid
    # length and on padded lanes.
    bmask = np.full((S, CP), -1e30, np.float32)
    col = 0
    for w, b, kh in zip(ws, bs, khs):
        c = int(w.shape[0])
        for t in range(kh):
            w_cat[:, t * CP + col: t * CP + col + c] = w[:, 0, t, :].T
        bmask[: S - kh + 1, col: col + c] = b[None, :]
        # INVARIANT the kernel's roll-based shift-add relies on:
        #   tap t of this branch is nonzero only for t < kh, and bmask masks
        #   rows s in [S-kh+1, S).  Every row a roll wraps (or that reads the
        #   next batch element) sits at s >= S - t >= S - kh + 1, i.e. inside
        #   the masked zone.  Do NOT change the mask value / valid-length
        #   region without rechecking this.
        assert (S - (S - kh + 1)) == kh - 1
        col += c

    fcw = np.zeros((CP, K), np.float32)
    fcw[:c_total, :] = np.asarray(params["fc_w"], np.float32).T
    fcb = np.asarray(params["fc_b"], np.float32).reshape(1, -1)

    return {
        "w_cat": jnp.asarray(w_cat, dtype=compute_dtype),   # (E, kh_max*CP)
        "bmask": jnp.asarray(bmask, dtype=jnp.float32),     # (S, CP)
        "fc_w": jnp.asarray(fcw, dtype=compute_dtype),      # (CP, K)
        "fc_b": jnp.asarray(fcb, dtype=jnp.float32),        # (1, K)
    }


# ---------------------------------------------------------------------------
# Forward wrapper: exactly one pallas_call, zero per-call layout ops.
# ---------------------------------------------------------------------------
def cnn_classifier_forward(x, prep, *, tb=None, vmem_limit_bytes=None):
    """tb=None: gridless whole-array call (best at tiny batch).
    tb=<int dividing B>: 1-D 'parallel' grid over the batch.  On v7x this is
    how the second TensorCore gets used; size tb against v7x's 64 MiB VMEM.
    On v5e/v6e (1 TC) maximize tb instead and raise vmem_limit_bytes (default
    scoped VMEM is 16/32 MiB vs 128 MiB physical)."""
    B, S, E = x.shape
    K = prep["fc_b"].shape[-1]
    CP = prep["bmask"].shape[1]
    kcols = prep["w_cat"].shape[1]
    x = x.astype(prep["w_cat"].dtype)            # optional bf16 input stream

    cost = pl.CostEstimate(
        flops=2 * B * S * E * kcols + 2 * B * CP * K,
        transcendentals=B * K,
        bytes_accessed=(x.size * x.dtype.itemsize + B * K * 4
                        + sum(int(a.size) * a.dtype.itemsize
                              for a in (prep["w_cat"], prep["bmask"],
                                        prep["fc_w"], prep["fc_b"]))),
    )
    out_shape = jax.ShapeDtypeStruct((B, K), jnp.float32)   # pinned to f32

    if tb is None or tb >= B:
        vmem = pl.BlockSpec(memory_space=pltpu.MemorySpace.VMEM)
        return pl.pallas_call(
            fused_textcnn_kernel,
            out_shape=out_shape,
            in_specs=[vmem, vmem, vmem, vmem, vmem],
            out_specs=vmem,
            cost_estimate=cost,
        )(x, prep["w_cat"], prep["bmask"], prep["fc_w"], prep["fc_b"])

    assert B % tb == 0, "tb must divide the batch size"
    return pl.pallas_call(
        fused_textcnn_kernel,
        out_shape=out_shape,
        grid_spec=pltpu.PrefetchScalarGridSpec(
            num_scalar_prefetch=0,
            grid=(B // tb,),
            in_specs=[
                pl.BlockSpec((tb, S, E), lambda i: (i, 0, 0)),
                # Constant block indices: weights are not re-fetched per step.
                pl.BlockSpec(prep["w_cat"].shape, lambda i: (0, 0)),
                pl.BlockSpec(prep["bmask"].shape, lambda i: (0, 0)),
                pl.BlockSpec(prep["fc_w"].shape, lambda i: (0, 0)),
                pl.BlockSpec(prep["fc_b"].shape, lambda i: (0, 0)),
            ],
            out_specs=pl.BlockSpec((tb, K), lambda i: (i, 0)),
        ),
        compiler_params=pltpu.CompilerParams(
            dimension_semantics=("parallel",),   # shard batch blocks across TCs (v7x)
            vmem_limit_bytes=vmem_limit_bytes,   # raise on v5e/v6e for very large tb
        ),
        cost_estimate=cost,
    )(x, prep["w_cat"], prep["bmask"], prep["fc_w"], prep["fc_b"])


# ---------------------------------------------------------------------------
# Pure-JAX reference (PyTorch-layout params) for verification.
# ---------------------------------------------------------------------------
def reference_forward(x, params):
    xs = x[:, None]                                  # (B, 1, S, E) == unsqueeze(1)
    outs = []
    for br in range(1, 4):
        w = params[f"conv{br}_w"]
        b = params[f"conv{br}_b"]
        conv = jax.lax.conv_general_dilated(
            xs, w, window_strides=(1, 1), padding="VALID",
            dimension_numbers=("NCHW", "OIHW", "NCHW"))
        conv = conv + b[None, :, None, None]
        conv = conv[..., 0]                          # squeeze(3)
        outs.append(jnp.max(jnp.maximum(conv, 0.0), axis=2))
    feat = jnp.concatenate(outs, axis=1)
    logits = feat @ params["fc_w"].T + params["fc_b"]
    return jax.nn.softmax(logits, axis=1)


if __name__ == "__main__":
    # Module hyper-params (in_channels must be 1: forward does x.unsqueeze(1)).
    num_classes = 4
    out_channels = (8, 8, 16)
    kernel_heights = (3, 4, 5)
    embed_dim = 32
    batch, seq_len = 2, 16

    key = jax.random.PRNGKey(0)
    ks = jax.random.split(key, 16)

    params = {}
    for i, (c, kh) in enumerate(zip(out_channels, kernel_heights)):
        params[f"conv{i+1}_w"] = 0.1 * jax.random.normal(
            ks[2 * i], (c, 1, kh, embed_dim), jnp.float32)
        params[f"conv{i+1}_b"] = 0.1 * jax.random.normal(
            ks[2 * i + 1], (c,), jnp.float32)
    params["fc_w"] = 0.1 * jax.random.normal(
        ks[10], (num_classes, sum(out_channels)), jnp.float32)
    params["fc_b"] = 0.1 * jax.random.normal(ks[11], (num_classes,), jnp.float32)

    x = jax.random.normal(ks[12], (batch, seq_len, embed_dim), jnp.float32)

    prep = prepare_params(params, seq_len)           # hoisted, model-load time

    # 1) Tiny-batch path (the spec's shapes): gridless whole-array call.
    fwd = jax.jit(functools.partial(cnn_classifier_forward, tb=None))
    out = jax.block_until_ready(fwd(x, prep))
    ref = jax.block_until_ready(reference_forward(x, params))
    assert out.shape == (batch, num_classes), out.shape
    assert jnp.allclose(out, ref, atol=1e-5, rtol=1e-5), (out, ref)

    # 2) Batched path: 1-D 'parallel' grid over the batch (v7x two-TC path).
    x_big = jax.random.normal(ks[13], (16, seq_len, embed_dim), jnp.float32)
    fwd_big = jax.jit(functools.partial(cnn_classifier_forward, tb=8))
    out_big = jax.block_until_ready(fwd_big(x_big, prep))
    ref_big = jax.block_until_ready(reference_forward(x_big, params))
    assert jnp.allclose(out_big, ref_big, atol=1e-5, rtol=1e-5), (out_big, ref_big)

    # 3) bf16 weight/input stream with f32 accumulation (large-batch lever).
    prep_bf16 = prepare_params(params, seq_len, compute_dtype=jnp.bfloat16)
    out_bf16 = jax.block_until_ready(fwd(x, prep_bf16))
    assert jnp.allclose(out_bf16, ref, atol=5e-2, rtol=5e-2), (out_bf16, ref)

    print("KERNEL_OK")
</pallas_src>

<mosaic_0001>
module attributes {stable_mosaic.version = 11 : i64} {
  func.func @fused_textcnn_kernel(%arg0: memref<2x16x32xf32, #tpu.memory_space<vmem>>, %arg1: memref<32x640xf32, #tpu.memory_space<vmem>>, %arg2: memref<16x128xf32, #tpu.memory_space<vmem>>, %arg3: memref<128x4xf32, #tpu.memory_space<vmem>>, %arg4: memref<1x4xf32, #tpu.memory_space<vmem>>, %arg5: memref<2x4xf32, #tpu.memory_space<vmem>>) attributes {dimension_semantics = [], scalar_prefetch = 0 : i64, scratch_operands = 0 : i64, tpu.core_type = #tpu.core_type<tc>} {
    %c0 = arith.constant 0 : index
    %c0_0 = arith.constant 0 : index
    %c0_1 = arith.constant 0 : index
    %0 = vector.load %arg0[%c0, %c0_0, %c0_1] : memref<2x16x32xf32, #tpu.memory_space<vmem>>, vector<2x16x32xf32>
    %1 = vector.shape_cast %0 : vector<2x16x32xf32> to vector<32x32xf32>
    %c0_2 = arith.constant 0 : index
    %c0_3 = arith.constant 0 : index
    %2 = vector.load %arg1[%c0_2, %c0_3] : memref<32x640xf32, #tpu.memory_space<vmem>>, vector<32x640xf32>
    %cst = arith.constant dense<0.000000e+00> : vector<32x640xf32>
    %3 = tpu.matmul %1, %2, %cst {dimension_numbers = #tpu.dot_dimension_numbers<[1], [0], [0], [1], [0, 0, 1, 1], [], []>} : vector<32x32xf32>, vector<32x640xf32>, vector<32x640xf32> -> vector<32x640xf32>
    %4 = vector.extract_strided_slice %3 {offsets = [0, 0], sizes = [32, 128], strides = [1, 1]} : vector<32x640xf32> to vector<32x128xf32>
    %5 = vector.extract_strided_slice %3 {offsets = [0, 128], sizes = [32, 128], strides = [1, 1]} : vector<32x640xf32> to vector<32x128xf32>
    %c31_i32 = arith.constant 31 : i32
    %6 = tpu.dynamic_rotate %5 by %c31_i32 dim 0 : vector<32x128xf32>, i32 -> vector<32x128xf32>
    %7 = arith.addf %4, %6 : vector<32x128xf32>
    %8 = vector.extract_strided_slice %3 {offsets = [0, 256], sizes = [32, 128], strides = [1, 1]} : vector<32x640xf32> to vector<32x128xf32>
    %c30_i32 = arith.constant 30 : i32
    %9 = tpu.dynamic_rotate %8 by %c30_i32 dim 0 : vector<32x128xf32>, i32 -> vector<32x128xf32>
    %10 = arith.addf %7, %9 : vector<32x128xf32>
    %11 = vector.extract_strided_slice %3 {offsets = [0, 384], sizes = [32, 128], strides = [1, 1]} : vector<32x640xf32> to vector<32x128xf32>
    %c29_i32 = arith.constant 29 : i32
    %12 = tpu.dynamic_rotate %11 by %c29_i32 dim 0 : vector<32x128xf32>, i32 -> vector<32x128xf32>
    %13 = arith.addf %10, %12 : vector<32x128xf32>
    %14 = vector.extract_strided_slice %3 {offsets = [0, 512], sizes = [32, 128], strides = [1, 1]} : vector<32x640xf32> to vector<32x128xf32>
    %c28_i32 = arith.constant 28 : i32
    %15 = tpu.dynamic_rotate %14 by %c28_i32 dim 0 : vector<32x128xf32>, i32 -> vector<32x128xf32>
    %16 = arith.addf %13, %15 : vector<32x128xf32>
    %17 = vector.shape_cast %16 : vector<32x128xf32> to vector<2x16x128xf32>
    %c0_4 = arith.constant 0 : index
    %c0_5 = arith.constant 0 : index
    %18 = vector.load %arg2[%c0_4, %c0_5] : memref<16x128xf32, #tpu.memory_space<vmem>>, vector<16x128xf32>
    %19 = vector.shape_cast %18 : vector<16x128xf32> to vector<1x16x128xf32>
    %20 = vector.broadcast %19 : vector<1x16x128xf32> to vector<2x16x128xf32>
    %21 = arith.addf %17, %20 : vector<2x16x128xf32>
    %cst_6 = arith.constant 0.000000e+00 : f32
    %22 = vector.broadcast %cst_6 : f32 to vector<2x16x128xf32>
    %23 = arith.maximumf %21, %22 : vector<2x16x128xf32>
    %cst_7 = arith.constant dense<0xFF800000> : vector<2x128xf32>
    %24 = vector.multi_reduction <maximumf>, %23, %cst_7 [1] : vector<2x16x128xf32> to vector<2x128xf32>
    %c0_8 = arith.constant 0 : index
    %c0_9 = arith.constant 0 : index
    %25 = vector.load %arg3[%c0_8, %c0_9] : memref<128x4xf32, #tpu.memory_space<vmem>>, vector<128x4xf32>
    %cst_10 = arith.constant dense<0.000000e+00> : vector<2x4xf32>
    %26 = tpu.matmul %24, %25, %cst_10 {dimension_numbers = #tpu.dot_dimension_numbers<[1], [0], [0], [1], [0, 0, 1, 1], [], []>} : vector<2x128xf32>, vector<128x4xf32>, vector<2x4xf32> -> vector<2x4xf32>
    %c0_11 = arith.constant 0 : index
    %c0_12 = arith.constant 0 : index
    %27 = vector.load %arg4[%c0_11, %c0_12] : memref<1x4xf32, #tpu.memory_space<vmem>>, vector<1x4xf32>
    %28 = vector.broadcast %27 : vector<1x4xf32> to vector<2x4xf32>
    %29 = arith.addf %26, %28 : vector<2x4xf32>
    %cst_13 = arith.constant dense<0xFF800000> : vector<2xf32>
    %30 = vector.multi_reduction <maximumf>, %29, %cst_13 [1] : vector<2x4xf32> to vector<2xf32>
    %31 = vector.shape_cast %30 : vector<2xf32> to vector<2x1xf32>
    %32 = vector.broadcast %31 : vector<2x1xf32> to vector<2x4xf32>
    %33 = arith.subf %29, %32 : vector<2x4xf32>
    %34 = math.exp %33 : vector<2x4xf32>
    %cst_14 = arith.constant dense<0.000000e+00> : vector<2xf32>
    %35 = vector.multi_reduction <add>, %34, %cst_14 [1] : vector<2x4xf32> to vector<2xf32>
    %36 = vector.shape_cast %35 : vector<2xf32> to vector<2x1xf32>
    %37 = tpu.reciprocal %36 {approx = true} : vector<2x1xf32> -> vector<2x1xf32>
    %38 = arith.mulf %36, %37 : vector<2x1xf32>
    %cst_15 = arith.constant 2.000000e+00 : f32
    %39 = vector.broadcast %cst_15 : f32 to vector<2x1xf32>
    %40 = arith.subf %39, %38 : vector<2x1xf32>
    %41 = arith.mulf %37, %40 : vector<2x1xf32>
    %42 = vector.broadcast %41 : vector<2x1xf32> to vector<2x4xf32>
    %43 = arith.mulf %34, %42 : vector<2x4xf32>
    %c0_16 = arith.constant 0 : index
    %c0_17 = arith.constant 0 : index
    %44 = vector.load %arg5[%c0_16, %c0_17] : memref<2x4xf32, #tpu.memory_space<vmem>>, vector<2x4xf32>
    tpu.vector_store %arg5[%c0_16, %c0_17], %43 {strides = array<i32>} : memref<2x4xf32, #tpu.memory_space<vmem>>, vector<2x4xf32>,
    return
  }
}

</mosaic_0001>

<llo_original>
// kernel: cnn_classifier_forward.1
$region0: #{cnn_classifier_forward.1}
  #allocation0 [shape = 'u32[]', space=smem, size = 0x4, offset = 0x4, fixed_abs, tag = 'smem constant byte address 0x4 - core index']
  #allocation1 [shape = 'u32[144,128]{1,0:T(1,128)}', space=vmem, size = 0x12000, scoped, tag = 'internal scratch']
  %s0 = inlined_call_operand.vmem [shape: f32[2,16,32], index: 0, kind: input, shape index: {}]
  %s1 = inlined_call_operand.hbm [shape: f32[32,640], index: 1, kind: input, shape index: {}]
  %s2 = inlined_call_operand.vmem [shape: f32[16,128], index: 2, kind: input, shape index: {}]
  %s3 = inlined_call_operand.vmem [shape: f32[128,4], index: 3, kind: input, shape index: {}]
  %s4 = inlined_call_operand.vmem [shape: f32[1,4], index: 4, kind: input, shape index: {}]
  %s5 = inlined_call_operand.hbm [shape: f32[2,4], index: 5, kind: output, shape index: {}]
  %s6 = sld [smem:[#allocation0]]
  $region34: #{cnn_classifier_forward.1} parent=0
    _
  %s8 = ssub.s32 1, %s6
  %s9 = scalar_select 0, %s8, %s6
  $region1: #{cnn_classifier_forward.1} parent=0
    #allocation2 [shape = 'u8[81920]{0}', space=vmem, size = 0x14000, scoped, tag = 'input window, operand 1, single buffered']
    #allocation3 [shape = 's32[1]{0}', space=sflag, size = 0x4, scoped, tag = 'scoped memory for cnn_classifier_forward.1']
    #allocation4 [shape = 's32[1]{0}', space=sflag, size = 0x4, scoped, tag = 'scoped memory for cnn_classifier_forward.1']
    #allocation5 [shape = 'u8[1024]{0}', space=vmem, size = 0x400, scoped, tag = 'output window, operand 0, single buffered']
    %10 = vsyncpa [#allocation3], 0
    %11 = vsyncpa [#allocation4], 0
    // Predicated region
    $region2: #{cnn_classifier_forward.1} parent=1 // pred_check
      _
    $region3: #{cnn_classifier_forward.1} parent=1 // pred_check_branch
      %13 = sbr.rel (0) target = $region5
    $region4: #{cnn_classifier_forward.1} parent=1 // pred_region
      _
    $region5: #{cnn_classifier_forward.1} parent=1 // pred_fallthru
      _
    // Predicated region
    $region6: #{cnn_classifier_forward.1} parent=1 // pred_check
      _
    $region7: #{cnn_classifier_forward.1} parent=1 // pred_check_branch
      %15 = sbr.rel (0) target = $region9
    $region8: #{cnn_classifier_forward.1} parent=1 // pred_region
      %s17 = ssub.s32 2560, 2560
      %18 = vsyncadd [#allocation3], %s17
      %s19 = sshll.u32 [#allocation2], 4
      %s20 = int_to_ptr.vmem [resolvable:$true] %s19
      %25 = dma.hbm_to_vmem [thread:$0]  %s1, 2560, %s20, [#allocation3], 640, 640, 40
    $region9: #{cnn_classifier_forward.1} parent=1 // pred_fallthru
      _
    // Predicated region
    $region10: #{cnn_classifier_forward.1} parent=1 // pred_check
      _
    $region11: #{cnn_classifier_forward.1} parent=1 // pred_check_branch
      %27 = sbr.rel (0) target = $region13
    $region12: #{cnn_classifier_forward.1} parent=1 // pred_region
      _
    $region13: #{cnn_classifier_forward.1} parent=1 // pred_fallthru
      _
    // Predicated region
    $region14: #{cnn_classifier_forward.1} parent=1 // pred_check
      _
    $region15: #{cnn_classifier_forward.1} parent=1 // pred_check_branch
      %29 = sbr.rel (0) target = $region17
    $region16: #{cnn_classifier_forward.1} parent=1 // pred_region
      _
    $region17: #{cnn_classifier_forward.1} parent=1 // pred_fallthru
      _
    // Predicated region
    $region18: #{cnn_classifier_forward.1} parent=1 // pred_check
      _
    $region19: #{cnn_classifier_forward.1} parent=1 // pred_check_branch
      %31 = sbr.rel (0) target = $region21
    $region20: #{cnn_classifier_forward.1} parent=1 // pred_region
      _
    $region21: #{cnn_classifier_forward.1} parent=1 // pred_fallthru
      _
    // Predicated region
    $region22: #{cnn_classifier_forward.1} parent=1 // pred_check
      _
    $region23: #{cnn_classifier_forward.1} parent=1 // pred_check_branch
      %33 = sbr.rel (0) target = $region25
    $region24: #{cnn_classifier_forward.1} parent=1 // pred_region
      %34 = dma.done [#allocation3], 2560
    $region25: #{cnn_classifier_forward.1} parent=1 // pred_fallthru
      _
    %v35 = vld [vmem:[%s0] sm:$0xff]
    %v36 = vld [vmem:[%s0 + $0x8] sm:$0xff]
    %v37 = vld [vmem:[%s0 + $0x10] sm:$0xff]
    %v38 = vld [vmem:[%s0 + $0x18] sm:$0xff]
    %v39 = vld [vmem:[#allocation2] sm:$0xff]
    %v40 = vld [vmem:[#allocation2 + $0x8] sm:$0xff]
    %v41 = vld [vmem:[#allocation2 + $0x10] sm:$0xff]
    %v42 = vld [vmem:[#allocation2 + $0x18] sm:$0xff]
    %v43 = vld [vmem:[#allocation2 + $0x20] sm:$0xff]
    %v44 = vld [vmem:[#allocation2 + $0x28] sm:$0xff]
    %v45 = vld [vmem:[#allocation2 + $0x30] sm:$0xff]
    %v46 = vld [vmem:[#allocation2 + $0x38] sm:$0xff]
    %v47 = vld [vmem:[#allocation2 + $0x40] sm:$0xff]
    %v48 = vld [vmem:[#allocation2 + $0x48] sm:$0xff]
    %v49 = vld [vmem:[#allocation2 + $0x50] sm:$0xff]
    %v50 = vld [vmem:[#allocation2 + $0x58] sm:$0xff]
    %v51 = vld [vmem:[#allocation2 + $0x60] sm:$0xff]
    %v52 = vld [vmem:[#allocation2 + $0x68] sm:$0xff]
    %v53 = vld [vmem:[#allocation2 + $0x70] sm:$0xff]
    %v54 = vld [vmem:[#allocation2 + $0x78] sm:$0xff]
    %v55 = vld [vmem:[#allocation2 + $0x80] sm:$0xff]
    %v56 = vld [vmem:[#allocation2 + $0x88] sm:$0xff]
    %v57 = vld [vmem:[#allocation2 + $0x90] sm:$0xff]
    %v58 = vld [vmem:[#allocation2 + $0x98] sm:$0xff]
    %vm59 = vcmask 261120
    %v61 = vsel %vm59, %v35, 0
    %v64 = vsel %vm59, %v36, 0
    %v67 = vsel %vm59, %v37, 0
    %v70 = vsel %vm59, %v38, 0
    %72 = vmatprep.subr.mxu0 0.0
    %73 = vmatpush1.msra.mxu0 0.0
    %74 = vmatprep.subr.mxu0 0.0
    %75 = vmatpush1.msra.mxu0 0.0
    %76 = vmatprep.subr.mxu0 0.0
    %77 = vmatpush1.msra.mxu0 0.0
    %78 = vmatprep.subr.mxu0 0.0
    %79 = vmatpush1.msra.mxu0 0.0
    %80 = vmatprep.subr.mxu0 0.0
    %81 = vmatpush1.msra.mxu0 0.0
    %82 = vmatprep.subr.mxu0 0.0
    %83 = vmatpush1.msra.mxu0 0.0
    %84 = vmatprep.subr.mxu0 0.0
    %85 = vmatpush1.msra.mxu0 0.0
    %86 = vmatprep.subr.mxu0 0.0
    %87 = vmatpush1.msra.mxu0 0.0
    %88 = vmatprep.subr.mxu0 0.0
    %89 = vmatpush1.msra.mxu0 0.0
    %90 = vmatprep.subr.mxu0 0.0
    %91 = vmatpush1.msra.mxu0 0.0
    %92 = vmatprep.subr.mxu0 0.0
    %93 = vmatpush1.msra.mxu0 0.0
    %94 = vmatprep.subr.mxu0 0.0
    %95 = vmatpush1.msra.mxu0 0.0
    %96 = vmatprep.subr.mxu0 %v55
    %97 = vmatpush1.msra.mxu0 %v54
    %98 = vmatprep.subr.mxu0 %v50
    %99 = vmatpush1.msra.mxu0 %v49
    %100 = vmatprep.subr.mxu0 %v45
    %101 = vmatpush1.msra.mxu0 %v44
    %102 = vmatprep.subr.mxu0 %v40
    %103 = vmatpush1.msra.mxu0 %v39
    %104 = vmatprep.subr.mxu0 0.0
    %105 = vmatpush2.msra.mxu0 0.0
    %106 = vmatprep.subr.mxu0 0.0
    %107 = vmatpush2.msra.mxu0 0.0
    %108 = vmatprep.subr.mxu0 0.0
    %109 = vmatpush2.msra.mxu0 0.0
    %110 = vmatprep.subr.mxu0 0.0
    %111 = vmatpush2.msra.mxu0 0.0
    %112 = vmatprep.subr.mxu0 0.0
    %113 = vmatpush2.msra.mxu0 0.0
    %114 = vmatprep.subr.mxu0 0.0
    %115 = vmatpush2.msra.mxu0 0.0
    %116 = vmatprep.subr.mxu0 0.0
    %117 = vmatpush2.msra.mxu0 0.0
    %118 = vmatprep.subr.mxu0 0.0
    %119 = vmatpush2.msra.mxu0 0.0
    %120 = vmatprep.subr.mxu0 0.0
    %121 = vmatpush2.msra.mxu0 0.0
    %122 = vmatprep.subr.mxu0 0.0
    %123 = vmatpush2.msra.mxu0 0.0
    %124 = vmatprep.subr.mxu0 0.0
    %125 = vmatpush2.msra.mxu0 0.0
    %126 = vmatprep.subr.mxu0 0.0
    %127 = vmatpush2.msra.mxu0 0.0
    %128 = vmatprep.subr.mxu0 0.0
    %129 = vmatpush2.msra.mxu0 0.0
    %130 = vmatprep.subr.mxu0 0.0
    %131 = vmatpush2.msra.mxu0 0.0
    %132 = vmatprep.subr.mxu0 0.0
    %133 = vmatpush2.msra.mxu0 0.0
    %134 = vmatprep.subr.mxu0 0.0
    %135 = vmatpush2.msra.mxu0 0.0
    %136 = vmatprep.mubr.f32.mxu0 0.0
    %137 = vmatmul.mubr.f32.gmra.mxu0 %v61
    %v138 = vpop.f32.mrf.mxu0
    %v139 = vadd.f32 0.0, %v138
    %v140 = vpop.f32.mrf.mxu0
    %v141 = vadd.f32 0.0, %v140
    %142 = vmatprep.mubr.f32.mxu0 0.0
    %143 = vmatmul.mubr.f32.gmra.mxu0 %v64
    %v144 = vpop.f32.mrf.mxu0
    %v145 = vadd.f32 0.0, %v144
    %v146 = vpop.f32.mrf.mxu0
    %v147 = vadd.f32 0.0, %v146
    %148 = vmatprep.mubr.f32.mxu0 0.0
    %149 = vmatmul.mubr.f32.gmra.mxu0 %v67
    %v150 = vpop.f32.mrf.mxu0
    %v151 = vadd.f32 0.0, %v150
    %v152 = vpop.f32.mrf.mxu0
    %v153 = vadd.f32 0.0, %v152
    %154 = vmatprep.mubr.f32.mxu0 0.0
    %155 = vmatmul.mubr.f32.gmra.mxu0 %v70
    %v156 = vpop.f32.mrf.mxu0
    %v157 = vadd.f32 0.0, %v156
    %v158 = vpop.f32.mrf.mxu0
    %v159 = vadd.f32 0.0, %v158
    %160 = vdwg.mxu0
    %161 = vmatprep.subr.mxu0 0.0
    %162 = vmatpush1.msra.mxu0 0.0
    %163 = vmatprep.subr.mxu0 0.0
    %164 = vmatpush1.msra.mxu0 0.0
    %165 = vmatprep.subr.mxu0 0.0
    %166 = vmatpush1.msra.mxu0 0.0
    %167 = vmatprep.subr.mxu0 0.0
    %168 = vmatpush1.msra.mxu0 0.0
    %169 = vmatprep.subr.mxu0 0.0
    %170 = vmatpush1.msra.mxu0 0.0
    %171 = vmatprep.subr.mxu0 0.0
    %172 = vmatpush1.msra.mxu0 0.0
    %173 = vmatprep.subr.mxu0 0.0
    %174 = vmatpush1.msra.mxu0 0.0
    %175 = vmatprep.subr.mxu0 0.0
    %176 = vmatpush1.msra.mxu0 0.0
    %177 = vmatprep.subr.mxu0 0.0
    %178 = vmatpush1.msra.mxu0 0.0
    %179 = vmatprep.subr.mxu0 0.0
    %180 = vmatpush1.msra.mxu0 0.0
    %181 = vmatprep.subr.mxu0 0.0
    %182 = vmatpush1.msra.mxu0 0.0
    %183 = vmatprep.subr.mxu0 0.0
    %184 = vmatpush1.msra.mxu0 0.0
    %185 = vmatprep.subr.mxu0 %v57
    %186 = vmatpush1.msra.mxu0 %v56
    %187 = vmatprep.subr.mxu0 %v52
    %188 = vmatpush1.msra.mxu0 %v51
    %189 = vmatprep.subr.mxu0 %v47
    %190 = vmatpush1.msra.mxu0 %v46
    %191 = vmatprep.subr.mxu0 %v42
    %192 = vmatpush1.msra.mxu0 %v41
    %193 = vmatprep.subr.mxu0 0.0
    %194 = vmatpush2.msra.mxu0 0.0
    %195 = vmatprep.subr.mxu0 0.0
    %196 = vmatpush2.msra.mxu0 0.0
    %197 = vmatprep.subr.mxu0 0.0
    %198 = vmatpush2.msra.mxu0 0.0
    %199 = vmatprep.subr.mxu0 0.0
    %200 = vmatpush2.msra.mxu0 0.0
    %201 = vmatprep.subr.mxu0 0.0
    %202 = vmatpush2.msra.mxu0 0.0
    %203 = vmatprep.subr.mxu0 0.0
    %204 = vmatpush2.msra.mxu0 0.0
    %205 = vmatprep.subr.mxu0 0.0
    %206 = vmatpush2.msra.mxu0 0.0
    %207 = vmatprep.subr.mxu0 0.0
    %208 = vmatpush2.msra.mxu0 0.0
    %209 = vmatprep.subr.mxu0 0.0
    %210 = vmatpush2.msra.mxu0 0.0
    %211 = vmatprep.subr.mxu0 0.0
    %212 = vmatpush2.msra.mxu0 0.0
    %213 = vmatprep.subr.mxu0 0.0
    %214 = vmatpush2.msra.mxu0 0.0
    %215 = vmatprep.subr.mxu0 0.0
    %216 = vmatpush2.msra.mxu0 0.0
    %217 = vmatprep.subr.mxu0 0.0
    %218 = vmatpush2.msra.mxu0 0.0
    %219 = vmatprep.subr.mxu0 0.0
    %220 = vmatpush2.msra.mxu0 0.0
    %221 = vmatprep.subr.mxu0 0.0
    %222 = vmatpush2.msra.mxu0 0.0
    %223 = vmatprep.subr.mxu0 0.0
    %224 = vmatpush2.msra.mxu0 0.0
    %225 = vmatprep.mubr.f32.mxu0 0.0
    %226 = vmatmul.mubr.f32.gmra.mxu0 %v61
    %v227 = vpop.f32.mrf.mxu0
    %v228 = vadd.f32 0.0, %v227
    %v229 = vpop.f32.mrf.mxu0
    %v230 = vadd.f32 0.0, %v229
    %231 = vmatprep.mubr.f32.mxu0 0.0
    %232 = vmatmul.mubr.f32.gmra.mxu0 %v64
    %v233 = vpop.f32.mrf.mxu0
    %v234 = vadd.f32 0.0, %v233
    %v235 = vpop.f32.mrf.mxu0
    %v236 = vadd.f32 0.0, %v235
    %237 = vmatprep.mubr.f32.mxu0 0.0
    %238 = vmatmul.mubr.f32.gmra.mxu0 %v67
    %v239 = vpop.f32.mrf.mxu0
    %v240 = vadd.f32 0.0, %v239
    %v241 = vpop.f32.mrf.mxu0
    %v242 = vadd.f32 0.0, %v241
    %243 = vmatprep.mubr.f32.mxu0 0.0
    %244 = vmatmul.mubr.f32.gmra.mxu0 %v70
    %v245 = vpop.f32.mrf.mxu0
    %v246 = vadd.f32 0.0, %v245
    %v247 = vpop.f32.mrf.mxu0
    %v248 = vadd.f32 0.0, %v247
    %249 = vdwg.mxu0
    %250 = vmatprep.subr.mxu0 0.0
    %251 = vmatpush1.msra.mxu0 0.0
    %252 = vmatprep.subr.mxu0 0.0
    %253 = vmatpush1.msra.mxu0 0.0
    %254 = vmatprep.subr.mxu0 0.0
    %255 = vmatpush1.msra.mxu0 0.0
    %256 = vmatprep.subr.mxu0 0.0
    %257 = vmatpush1.msra.mxu0 0.0
    %258 = vmatprep.subr.mxu0 0.0
    %259 = vmatpush1.msra.mxu0 0.0
    %260 = vmatprep.subr.mxu0 0.0
    %261 = vmatpush1.msra.mxu0 0.0
    %262 = vmatprep.subr.mxu0 0.0
    %263 = vmatpush1.msra.mxu0 0.0
    %264 = vmatprep.subr.mxu0 0.0
    %265 = vmatpush1.msra.mxu0 0.0
    %266 = vmatprep.subr.mxu0 0.0
    %267 = vmatpush1.msra.mxu0 0.0
    %268 = vmatprep.subr.mxu0 0.0
    %269 = vmatpush1.msra.mxu0 0.0
    %270 = vmatprep.subr.mxu0 0.0
    %271 = vmatpush1.msra.mxu0 0.0
    %272 = vmatprep.subr.mxu0 0.0
    %273 = vmatpush1.msra.mxu0 0.0
    %274 = vmatprep.subr.mxu0 0.0
    %275 = vmatpush1.msra.mxu0 %v58
    %276 = vmatprep.subr.mxu0 0.0
    %277 = vmatpush1.msra.mxu0 %v53
    %278 = vmatprep.subr.mxu0 0.0
    %279 = vmatpush1.msra.mxu0 %v48
    %280 = vmatprep.subr.mxu0 0.0
    %281 = vmatpush1.msra.mxu0 %v43
    %282 = vmatprep.subr.mxu0 0.0
    %283 = vmatpush2.msra.mxu0 0.0
    %284 = vmatprep.subr.mxu0 0.0
    %285 = vmatpush2.msra.mxu0 0.0
    %286 = vmatprep.subr.mxu0 0.0
    %287 = vmatpush2.msra.mxu0 0.0
    %288 = vmatprep.subr.mxu0 0.0
    %289 = vmatpush2.msra.mxu0 0.0
    %290 = vmatprep.subr.mxu0 0.0
    %291 = vmatpush2.msra.mxu0 0.0
    %292 = vmatprep.subr.mxu0 0.0
    %293 = vmatpush2.msra.mxu0 0.0
    %294 = vmatprep.subr.mxu0 0.0
    %295 = vmatpush2.msra.mxu0 0.0
    %296 = vmatprep.subr.mxu0 0.0
    %297 = vmatpush2.msra.mxu0 0.0
    %298 = vmatprep.subr.mxu0 0.0
    %299 = vmatpush2.msra.mxu0 0.0
    %300 = vmatprep.subr.mxu0 0.0
    %301 = vmatpush2.msra.mxu0 0.0
    %302 = vmatprep.subr.mxu0 0.0
    %303 = vmatpush2.msra.mxu0 0.0
    %304 = vmatprep.subr.mxu0 0.0
    %305 = vmatpush2.msra.mxu0 0.0
    %306 = vmatprep.subr.mxu0 0.0
    %307 = vmatpush2.msra.mxu0 0.0
    %308 = vmatprep.subr.mxu0 0.0
    %309 = vmatpush2.msra.mxu0 0.0
    %310 = vmatprep.subr.mxu0 0.0
    %311 = vmatpush2.msra.mxu0 0.0
    %312 = vmatprep.subr.mxu0 0.0
    %313 = vmatpush2.msra.mxu0 0.0
    %314 = vmatprep.mubr.f32.mxu0 0.0
    %315 = vmatmul.mubr.f32.gmra.mxu0 %v61
    %v316 = vpop.f32.mrf.mxu0
    %v317 = vadd.f32 0.0, %v316
    %v318 = vpop.f32.mrf.mxu0
    %319 = vmatprep.mubr.f32.mxu0 0.0
    %320 = vmatmul.mubr.f32.gmra.mxu0 %v64
    %v321 = vpop.f32.mrf.mxu0
    %v322 = vadd.f32 0.0, %v321
    %v323 = vpop.f32.mrf.mxu0
    %324 = vmatprep.mubr.f32.mxu0 0.0
    %325 = vmatmul.mubr.f32.gmra.mxu0 %v67
    %v326 = vpop.f32.mrf.mxu0
    %v327 = vadd.f32 0.0, %v326
    %v328 = vpop.f32.mrf.mxu0
    %329 = vmatprep.mubr.f32.mxu0 0.0
    %330 = vmatmul.mubr.f32.gmra.mxu0 %v70
    %v331 = vpop.f32.mrf.mxu0
    %v332 = vadd.f32 0.0, %v331
    %v333 = vpop.f32.mrf.mxu0
    %334 = vdwg.mxu0
    %v335 = vrot.slane %v141, 1
    %v336 = vrot.slane %v147, 1
    %v337 = vrot.slane %v153, 1
    %v338 = vrot.slane %v159, 1
    %v339 = vlaneseq
    %v340 = vshrl.u32 %v339, 7
    %vm341 = vcmp.lt.s32.totalorder %v340, 7
    %v342 = vsel %vm341, %v337, %v338
    %v343 = vsel %vm341, %v336, %v337
    %v344 = vsel %vm341, %v335, %v336
    %v345 = vsel %vm341, %v338, %v335
    %v346 = vadd.f32 %v139, %v344
    %v347 = vadd.f32 %v145, %v343
    %v348 = vadd.f32 %v151, %v342
    %v349 = vadd.f32 %v157, %v345
    %v350 = vrot.slane %v228, 2
    %v351 = vrot.slane %v234, 2
    %v352 = vrot.slane %v240, 2
    %v353 = vrot.slane %v246, 2
    %vm354 = vcmp.lt.s32.totalorder %v340, 6
    %v355 = vsel %vm354, %v352, %v353
    %v356 = vsel %vm354, %v351, %v352
    %v357 = vsel %vm354, %v350, %v351
    %v358 = vsel %vm354, %v353, %v350
    %v359 = vadd.f32 %v346, %v357
    %v360 = vadd.f32 %v347, %v356
    %v361 = vadd.f32 %v348, %v355
    %v362 = vadd.f32 %v349, %v358
    %v363 = vrot.slane %v230, 3
    %v364 = vrot.slane %v236, 3
    %v365 = vrot.slane %v242, 3
    %v366 = vrot.slane %v248, 3
    %vm367 = vcmp.lt.s32.totalorder %v340, 5
    %v368 = vsel %vm367, %v365, %v366
    %v369 = vsel %vm367, %v364, %v365
    %v370 = vsel %vm367, %v363, %v364
    %v371 = vsel %vm367, %v366, %v363
    %v372 = vadd.f32 %v359, %v370
    %v373 = vadd.f32 %v360, %v369
    %v374 = vadd.f32 %v361, %v368
    %v375 = vadd.f32 %v362, %v371
    %v376 = vrot.slane %v317, 4
    %v377 = vrot.slane %v322, 4
    %v378 = vrot.slane %v327, 4
    %v379 = vrot.slane %v332, 4
    %vm380 = vcmp.lt.s32.totalorder %v340, 4
    %v381 = vsel %vm380, %v378, %v379
    %v382 = vsel %vm380, %v377, %v378
    %v383 = vsel %vm380, %v376, %v377
    %v384 = vsel %vm380, %v379, %v376
    %v385 = vadd.f32 %v372, %v383
    %v386 = vadd.f32 %v373, %v382
    %v387 = vadd.f32 %v374, %v381
    %v388 = vadd.f32 %v375, %v384
    %v389 = vld [vmem:[%s2] sm:$0xff]
    %v390 = vld [vmem:[%s2 + $0x8] sm:$0xff]
    %v391 = vadd.f32 %v385, %v389
    %v392 = vadd.f32 %v386, %v390
    %v393 = vadd.f32 %v387, %v389
    %v394 = vadd.f32 %v388, %v390
    %v395 = vmax.f32 %v391, 0.0
    %v396 = vmax.f32 %v392, 0.0
    %v397 = vmax.f32 %v393, 0.0
    %v398 = vmax.f32 %v394, 0.0
    %v399 = vmax.f32 %v395, %v396
    %v400 = vrot.slane %v399, 4
    %v401 = vmax.f32 %v399, %v400
    %v402 = vrot.slane %v401, 2
    %v403 = vmax.f32 %v401, %v402
    %v404 = vrot.slane %v403, 1
    %v405 = vmax.f32 %v403, %v404
    %v406 = vmax.f32 %v397, %v398
    %v407 = vrot.slane %v406, 4
    %v408 = vmax.f32 %v406, %v407
    %v409 = vrot.slane %v408, 2
    %v410 = vmax.f32 %v408, %v409
    %v411 = vrot.slane %v410, 1
    %v412 = vmax.f32 %v410, %v411
    %v413 = vld [vmem:[%s3] sm:$0xff]
    %v414 = vld [vmem:[%s3 + $0x8] sm:$0xff]
    %v415 = vld [vmem:[%s3 + $0x10] sm:$0xff]
    %v416 = vld [vmem:[%s3 + $0x18] sm:$0xff]
    %v417 = vld [vmem:[%s3 + $0x20] sm:$0xff]
    %v418 = vld [vmem:[%s3 + $0x28] sm:$0xff]
    %v419 = vld [vmem:[%s3 + $0x30] sm:$0xff]
    %v420 = vld [vmem:[%s3 + $0x38] sm:$0xff]
    %v421 = vld [vmem:[%s3 + $0x40] sm:$0xff]
    %v422 = vld [vmem:[%s3 + $0x48] sm:$0xff]
    %v423 = vld [vmem:[%s3 + $0x50] sm:$0xff]
    %v424 = vld [vmem:[%s3 + $0x58] sm:$0xff]
    %v425 = vld [vmem:[%s3 + $0x60] sm:$0xff]
    %v426 = vld [vmem:[%s3 + $0x68] sm:$0xff]
    %v427 = vld [vmem:[%s3 + $0x70] sm:$0xff]
    %v428 = vld [vmem:[%s3 + $0x78] sm:$0xff]
    %v429 = vld [vmem:[%s4] sm:$0x1]
    %v431 = vlaneseq
    %v432 = vshrl.u32 %v431, 7
    %v433 = vsub.s32 0, %v432
    %v434 = vrot.slane %v429, %v433
    %vm438 = vcmask 1041409
    %v439 = vsel %vm438, %v412, %v405
    %441 = vmatprep.subr.mxu0 0.0
    %442 = vmatpush1.msra.mxu0 %v428
    %443 = vmatprep.subr.mxu0 0.0
    %444 = vmatpush1.msra.mxu0 %v427
    %445 = vmatprep.subr.mxu0 0.0
    %446 = vmatpush1.msra.mxu0 %v426
    %447 = vmatprep.subr.mxu0 0.0
    %448 = vmatpush1.msra.mxu0 %v425
    %449 = vmatprep.subr.mxu0 0.0
    %450 = vmatpush1.msra.mxu0 %v424
    %451 = vmatprep.subr.mxu0 0.0
    %452 = vmatpush1.msra.mxu0 %v423
    %453 = vmatprep.subr.mxu0 0.0
    %454 = vmatpush1.msra.mxu0 %v422
    %455 = vmatprep.subr.mxu0 0.0
    %456 = vmatpush1.msra.mxu0 %v421
    %457 = vmatprep.subr.mxu0 0.0
    %458 = vmatpush1.msra.mxu0 %v420
    %459 = vmatprep.subr.mxu0 0.0
    %460 = vmatpush1.msra.mxu0 %v419
    %461 = vmatprep.subr.mxu0 0.0
    %462 = vmatpush1.msra.mxu0 %v418
    %463 = vmatprep.subr.mxu0 0.0
    %464 = vmatpush1.msra.mxu0 %v417
    %465 = vmatprep.subr.mxu0 0.0
    %466 = vmatpush1.msra.mxu0 %v416
    %467 = vmatprep.subr.mxu0 0.0
    %468 = vmatpush1.msra.mxu0 %v415
    %469 = vmatprep.subr.mxu0 0.0
    %470 = vmatpush1.msra.mxu0 %v414
    %471 = vmatprep.subr.mxu0 0.0
    %472 = vmatpush1.msra.mxu0 %v413
    %473 = vmatprep.subr.mxu0 0.0
    %474 = vmatpush2.msra.mxu0 0.0
    %475 = vmatprep.subr.mxu0 0.0
    %476 = vmatpush2.msra.mxu0 0.0
    %477 = vmatprep.subr.mxu0 0.0
    %478 = vmatpush2.msra.mxu0 0.0
    %479 = vmatprep.subr.mxu0 0.0
    %480 = vmatpush2.msra.mxu0 0.0
    %481 = vmatprep.subr.mxu0 0.0
    %482 = vmatpush2.msra.mxu0 0.0
    %483 = vmatprep.subr.mxu0 0.0
    %484 = vmatpush2.msra.mxu0 0.0
    %485 = vmatprep.subr.mxu0 0.0
    %486 = vmatpush2.msra.mxu0 0.0
    %487 = vmatprep.subr.mxu0 0.0
    %488 = vmatpush2.msra.mxu0 0.0
    %489 = vmatprep.subr.mxu0 0.0
    %490 = vmatpush2.msra.mxu0 0.0
    %491 = vmatprep.subr.mxu0 0.0
    %492 = vmatpush2.msra.mxu0 0.0
    %493 = vmatprep.subr.mxu0 0.0
    %494 = vmatpush2.msra.mxu0 0.0
    %495 = vmatprep.subr.mxu0 0.0
    %496 = vmatpush2.msra.mxu0 0.0
    %497 = vmatprep.subr.mxu0 0.0
    %498 = vmatpush2.msra.mxu0 0.0
    %499 = vmatprep.subr.mxu0 0.0
    %500 = vmatpush2.msra.mxu0 0.0
    %501 = vmatprep.subr.mxu0 0.0
    %502 = vmatpush2.msra.mxu0 0.0
    %503 = vmatprep.subr.mxu0 0.0
    %504 = vmatpush2.msra.mxu0 0.0
    %505 = vmatprep.mubr.f32.mxu0 0.0
    %506 = vmatmul.mubr.f32.gmra.mxu0 %v439
    %v507 = vpop.f32.mrf.mxu0
    %v508 = vadd.f32 %v434, %v507
    %v509 = vpop.f32.mrf.mxu0
    %510 = vdwg.mxu0
    %vm511 = vcmask 25600
    %v512 = vsel %vm511, %v508, -inf
    %513 = vmax.xlane.f32.xlu0 %v512
    %v514 = vpop.xlane.xlu0 %513
    %v515 = vsub.f32 %v508, %v514
    %v516 = vmul.f32 %v515, 1.442695
    %v517 = vpow.pop %v516
    %v518 = vsel %vm511, %v517, 0.0
    %519 = vadd.xlane.f32.xlu0 %v518
    %v520 = vpop.xlane.xlu0 %519
    %v521 = vrcp.pop %v520
    %v522 = vmul.f32 %v520, %v521
    %v523 = vsub.f32 2.0, %v522
    %v524 = vmul.f32 %v521, %v523
    %v525 = vmul.f32 %v517, %v524
    %526 = vst.msk [vmem:[#allocation5] sm:$0x3] %vm511, %v525
    // Predicated region
    $region26: #{cnn_classifier_forward.1} parent=1 // pred_check
      _
    $region27: #{cnn_classifier_forward.1} parent=1 // pred_check_branch
      %528 = sbr.rel (0) target = $region29
    $region28: #{cnn_classifier_forward.1} parent=1 // pred_region
      %s530 = ssub.s32 32, 32
      %531 = vsyncadd [#allocation4], %s530
      %s533 = sshll.u32 [#allocation5], 4
      %s534 = int_to_ptr.vmem [resolvable:$true] %s533
      %536 = dma.vmem_to_hbm [thread:$0]  %s534, 32, %s5, [#allocation4]
    $region29: #{cnn_classifier_forward.1} parent=1 // pred_fallthru
      _
    // Predicated region
    $region30: #{cnn_classifier_forward.1} parent=1 // pred_check
      _
    $region31: #{cnn_classifier_forward.1} parent=1 // pred_check_branch
      %538 = sbr.rel (0) target = $region33
    $region32: #{cnn_classifier_forward.1} parent=1 // pred_region
      %539 = dma.done [#allocation4], 32
    $region33: #{cnn_classifier_forward.1} parent=1 // pred_fallthru
      _
    %540 = vsyncpa [#allocation3], 1
    %541 = vsyncpa [#allocation4], 1

</llo_original>
